<compile_context>
chip_gen: v7x
topology: tpu7x:2x2x1
jax: 0.10.0
libtpu: 0.0.40
codegen_flags: <defaults>
</compile_context>

<pallas_src>
import functools
import math

import jax
import jax.numpy as jnp
from jax.experimental import pallas as pl
from jax.experimental.pallas import tpu as pltpu

LANE = 128
SUBLANE = 8


def _ceil_to(x, m):
    return ((x + m - 1) // m) * m


# ----------------------------------------------------------------------------
# Pallas kernel: fused gather (one-hot matmul) -> Linear -> Swish -> Linear
# ----------------------------------------------------------------------------
def time_embedding_kernel(t_ref, table_ref, w1_ref, b1_ref, w2_ref, b2_ref, o_ref):
    t = t_ref[...]                                   # [TB, 1] int32 timesteps
    tb = t_ref.shape[0]
    t_rows = table_ref.shape[0]                      # T padded to 128

    # Fused embedding gather: one-hot(t) @ table on the MXU (exact 1.0/0.0 rows).
    iota = jax.lax.broadcasted_iota(jnp.int32, (tb, t_rows), 1)
    onehot = (iota == t).astype(jnp.float32)         # [TB, T_pad]
    x = jnp.dot(onehot, table_ref[...], preferred_element_type=jnp.float32)

    # Linear -> Swish -> Linear (all dims 128-padded; zero pads are exact).
    h = jnp.dot(x, w1_ref[...], preferred_element_type=jnp.float32) + b1_ref[...]
    h = h * jax.nn.sigmoid(h)                        # Swish (sigmoid -> EUP)
    y = jnp.dot(h, w2_ref[...], preferred_element_type=jnp.float32) + b2_ref[...]
    o_ref[...] = y.astype(o_ref.dtype)


@functools.partial(jax.jit, static_argnames=("dim",))
def time_embedding_forward(t, table_pad, w1t_pad, b1_pad, w2t_pad, b2_pad, dim):
    """t: [B] integer timesteps. Padded params are 128-lane padded, pre-transposed."""
    B = t.shape[0]
    T_pad, d_model_pad = table_pad.shape
    dim_h_pad = w1t_pad.shape[1]
    dim_o_pad = w2t_pad.shape[1]

    # Batch tiling: TB multiple of 8 (sublane), capped so VMEM stays small even
    # on v7x (64 MiB physical / 32 MiB default scoped limit).
    TB = min(512, _ceil_to(B, SUBLANE))
    B_pad = _ceil_to(B, TB)
    grid = (B_pad // TB,)

    t_idx = jnp.zeros((B_pad, 1), jnp.int32).at[:B, 0].set(t.astype(jnp.int32))

    flops = 2 * B_pad * (
        T_pad * d_model_pad + d_model_pad * dim_h_pad + dim_h_pad * dim_o_pad
    )
    bytes_accessed = 4 * (
        B_pad                                   # t (int32)
        + T_pad * d_model_pad                   # table
        + d_model_pad * dim_h_pad + dim_h_pad   # W1^T, b1
        + dim_h_pad * dim_o_pad + dim_o_pad     # W2^T, b2
        + B_pad * dim_o_pad                     # output
    )
    cost = pl.CostEstimate(
        flops=flops,
        transcendentals=B_pad * dim_h_pad,      # sigmoid -> exp on the EUP
        bytes_accessed=bytes_accessed,
    )

    out = pl.pallas_call(
        time_embedding_kernel,
        out_shape=jax.ShapeDtypeStruct((B_pad, dim_o_pad), jnp.float32),
        grid=grid,
        in_specs=[
            pl.BlockSpec((TB, 1), lambda i: (i, 0)),                    # t indices
            pl.BlockSpec((T_pad, d_model_pad), lambda i: (0, 0)),       # table (resident)
            pl.BlockSpec((d_model_pad, dim_h_pad), lambda i: (0, 0)),   # W1^T (resident)
            pl.BlockSpec((1, dim_h_pad), lambda i: (0, 0)),             # b1
            pl.BlockSpec((dim_h_pad, dim_o_pad), lambda i: (0, 0)),     # W2^T (resident)
            pl.BlockSpec((1, dim_o_pad), lambda i: (0, 0)),             # b2
        ],
        out_specs=pl.BlockSpec((TB, dim_o_pad), lambda i: (i, 0)),
        compiler_params=pltpu.CompilerParams(
            dimension_semantics=("parallel",),   # batch axis -> both v7x TCs
        ),
        cost_estimate=cost,
    )(t_idx, table_pad, w1t_pad, b1_pad, w2t_pad, b2_pad)

    return out[:B, :dim]


# ----------------------------------------------------------------------------
# Module construction (deterministic parameters, mirrors PyTorch __init__)
# ----------------------------------------------------------------------------
def make_sinusoidal_table(T, d_model):
    assert d_model % 2 == 0
    emb = jnp.arange(0, d_model, 2, dtype=jnp.float32) / d_model * math.log(10000.0)
    emb = jnp.exp(-emb)                               # [d_model//2]
    pos = jnp.arange(T, dtype=jnp.float32)            # [T]
    emb = pos[:, None] * emb[None, :]                 # [T, d_model//2]
    emb = jnp.stack([jnp.sin(emb), jnp.cos(emb)], axis=-1)  # [T, d_model//2, 2]
    return emb.reshape(T, d_model)                    # interleaved sin/cos


def xavier_uniform(key, out_features, in_features):
    bound = math.sqrt(6.0 / (in_features + out_features))
    # PyTorch Linear weight layout [out, in]; transposed/padded below for the kernel.
    return jax.random.uniform(
        key, (out_features, in_features), jnp.float32, -bound, bound
    )


class TimeEmbeddingPallas:
    def __init__(self, T, d_model, dim, key):
        assert d_model % 2 == 0
        self.T, self.d_model, self.dim = T, d_model, dim
        self.table = make_sinusoidal_table(T, d_model)            # [T, d_model]
        k1, k2 = jax.random.split(key)
        self.w1 = xavier_uniform(k1, dim, d_model)                 # [dim, d_model]
        self.b1 = jnp.zeros((dim,), jnp.float32)
        self.w2 = xavier_uniform(k2, dim, dim)                     # [dim, dim]
        self.b2 = jnp.zeros((dim,), jnp.float32)

        # One-time lane-dense padding (done at init, not per forward call).
        T_pad = _ceil_to(T, LANE)
        dmp = _ceil_to(d_model, LANE)
        dhp = _ceil_to(dim, LANE)
        dop = _ceil_to(dim, LANE)
        self._table_pad = (
            jnp.zeros((T_pad, dmp), jnp.float32).at[:T, :d_model].set(self.table)
        )
        self._w1t_pad = (
            jnp.zeros((dmp, dhp), jnp.float32).at[:d_model, :dim].set(self.w1.T)
        )
        self._b1_pad = jnp.zeros((1, dhp), jnp.float32).at[0, :dim].set(self.b1)
        self._w2t_pad = (
            jnp.zeros((dhp, dop), jnp.float32).at[:dim, :dim].set(self.w2.T)
        )
        self._b2_pad = jnp.zeros((1, dop), jnp.float32).at[0, :dim].set(self.b2)

    def __call__(self, t):
        return time_embedding_forward(
            t, self._table_pad, self._w1t_pad, self._b1_pad,
            self._w2t_pad, self._b2_pad, self.dim,
        )


# ----------------------------------------------------------------------------
# Reference (pure JAX, unpadded) for sanity check
# ----------------------------------------------------------------------------
def reference_forward(mod, t):
    x = jnp.take(mod.table, t, axis=0)
    h = x @ mod.w1.T + mod.b1[None, :]
    h = h * jax.nn.sigmoid(h)
    return h @ mod.w2.T + mod.b2[None, :]


if __name__ == "__main__":
    T, d_model, dim = 32, 32, 64
    key = jax.random.PRNGKey(0)
    k_params, k_t1, k_t2 = jax.random.split(key, 3)

    mod = TimeEmbeddingPallas(T, d_model, dim, k_params)

    # Main small test (B = 8).
    t1 = jax.random.randint(k_t1, (8,), 0, T, dtype=jnp.int32)
    out1 = jax.block_until_ready(mod(t1))
    ref1 = reference_forward(mod, t1)
    assert out1.shape == (8, dim)
    assert jnp.allclose(out1, ref1, atol=1e-4, rtol=1e-4), float(
        jnp.max(jnp.abs(out1 - ref1))
    )

    # Ragged-batch test (B = 19, exercises batch padding path).
    t2 = jax.random.randint(k_t2, (19,), 0, T, dtype=jnp.int32)
    out2 = jax.block_until_ready(mod(t2))
    ref2 = reference_forward(mod, t2)
    assert out2.shape == (19, dim)
    assert jnp.allclose(out2, ref2, atol=1e-4, rtol=1e-4), float(
        jnp.max(jnp.abs(out2 - ref2))
    )

    print("KERNEL_OK")
</pallas_src>

<mosaic_0001>
module attributes {stable_mosaic.version = 11 : i64} {
  func.func @time_embedding_kernel(%arg0: i32, %arg1: memref<8x1xi32, #tpu.memory_space<vmem>>, %arg2: memref<128x128xf32, #tpu.memory_space<vmem>>, %arg3: memref<128x128xf32, #tpu.memory_space<vmem>>, %arg4: memref<1x128xf32, #tpu.memory_space<vmem>>, %arg5: memref<128x128xf32, #tpu.memory_space<vmem>>, %arg6: memref<1x128xf32, #tpu.memory_space<vmem>>, %arg7: memref<8x128xf32, #tpu.memory_space<vmem>>) attributes {dimension_semantics = [#tpu.dimension_semantics<parallel>], iteration_bounds = array<i64: 1>, scalar_prefetch = 0 : i64, scratch_operands = 0 : i64, tpu.core_type = #tpu.core_type<tc>, window_params = [{transform_indices = @transform_0, window_bounds = array<i64: 8, 1>}, {pipeline_mode = #tpu.pipeline_mode<synchronous>, transform_indices = @transform_1, window_bounds = array<i64: 128, 128>}, {pipeline_mode = #tpu.pipeline_mode<synchronous>, transform_indices = @transform_2, window_bounds = array<i64: 128, 128>}, {pipeline_mode = #tpu.pipeline_mode<synchronous>, transform_indices = @transform_3, window_bounds = array<i64: 1, 128>}, {pipeline_mode = #tpu.pipeline_mode<synchronous>, transform_indices = @transform_4, window_bounds = array<i64: 128, 128>}, {pipeline_mode = #tpu.pipeline_mode<synchronous>, transform_indices = @transform_5, window_bounds = array<i64: 1, 128>}, {transform_indices = @transform_6, window_bounds = array<i64: 8, 128>}]} {
    %c0 = arith.constant 0 : index
    %c0_0 = arith.constant 0 : index
    %0 = vector.load %arg1[%c0, %c0_0] : memref<8x1xi32, #tpu.memory_space<vmem>>, vector<8x1xi32>
    %1 = tpu.iota {dimensions = array<i32: 1>} : vector<8x128xi32>
    %2 = vector.broadcast %0 : vector<8x1xi32> to vector<8x128xi32>
    %3 = arith.cmpi eq, %1, %2 : vector<8x128xi32>
    %4 = arith.extui %3 : vector<8x128xi1> to vector<8x128xi32>
    %5 = arith.sitofp %4 : vector<8x128xi32> to vector<8x128xf32>
    %c0_1 = arith.constant 0 : index
    %c0_2 = arith.constant 0 : index
    %6 = vector.load %arg2[%c0_1, %c0_2] : memref<128x128xf32, #tpu.memory_space<vmem>>, vector<128x128xf32>
    %cst = arith.constant dense<0.000000e+00> : vector<8x128xf32>
    %7 = tpu.matmul %5, %6, %cst {dimension_numbers = #tpu.dot_dimension_numbers<[1], [0], [0], [1], [0, 0, 1, 1], [], []>} : vector<8x128xf32>, vector<128x128xf32>, vector<8x128xf32> -> vector<8x128xf32>
    %c0_3 = arith.constant 0 : index
    %c0_4 = arith.constant 0 : index
    %8 = vector.load %arg3[%c0_3, %c0_4] : memref<128x128xf32, #tpu.memory_space<vmem>>, vector<128x128xf32>
    %cst_5 = arith.constant dense<0.000000e+00> : vector<8x128xf32>
    %9 = tpu.matmul %7, %8, %cst_5 {dimension_numbers = #tpu.dot_dimension_numbers<[1], [0], [0], [1], [0, 0, 1, 1], [], []>} : vector<8x128xf32>, vector<128x128xf32>, vector<8x128xf32> -> vector<8x128xf32>
    %c0_6 = arith.constant 0 : index
    %c0_7 = arith.constant 0 : index
    %10 = vector.load %arg4[%c0_6, %c0_7] : memref<1x128xf32, #tpu.memory_space<vmem>>, vector<1x128xf32>
    %11 = vector.broadcast %10 : vector<1x128xf32> to vector<8x128xf32>
    %12 = arith.addf %9, %11 : vector<8x128xf32>
    %13 = arith.negf %12 : vector<8x128xf32>
    %14 = math.exp %13 : vector<8x128xf32>
    %cst_8 = arith.constant 1.000000e+00 : f32
    %15 = vector.broadcast %cst_8 : f32 to vector<8x128xf32>
    %16 = arith.addf %15, %14 : vector<8x128xf32>
    %17 = arith.divf %15, %16 : vector<8x128xf32>
    %18 = arith.mulf %12, %17 : vector<8x128xf32>
    %c0_9 = arith.constant 0 : index
    %c0_10 = arith.constant 0 : index
    %19 = vector.load %arg5[%c0_9, %c0_10] : memref<128x128xf32, #tpu.memory_space<vmem>>, vector<128x128xf32>
    %cst_11 = arith.constant dense<0.000000e+00> : vector<8x128xf32>
    %20 = tpu.matmul %18, %19, %cst_11 {dimension_numbers = #tpu.dot_dimension_numbers<[1], [0], [0], [1], [0, 0, 1, 1], [], []>} : vector<8x128xf32>, vector<128x128xf32>, vector<8x128xf32> -> vector<8x128xf32>
    %c0_12 = arith.constant 0 : index
    %c0_13 = arith.constant 0 : index
    %21 = vector.load %arg6[%c0_12, %c0_13] : memref<1x128xf32, #tpu.memory_space<vmem>>, vector<1x128xf32>
    %22 = vector.broadcast %21 : vector<1x128xf32> to vector<8x128xf32>
    %23 = arith.addf %20, %22 : vector<8x128xf32>
    %c0_14 = arith.constant 0 : index
    %c0_15 = arith.constant 0 : index
    %24 = vector.load %arg7[%c0_14, %c0_15] : memref<8x128xf32, #tpu.memory_space<vmem>>, vector<8x128xf32>
    tpu.vector_store %arg7[%c0_14, %c0_15], %23 {strides = array<i32>} : memref<8x128xf32, #tpu.memory_space<vmem>>, vector<8x128xf32>,
    return
  }
  func.func @transform_0(%arg0: i32) -> (i32, i32) {
    %c0_i32 = arith.constant 0 : i32
    %c0_i32_0 = arith.constant 0 : i32
    return %arg0, %c0_i32 : i32, i32
  }
  func.func @transform_1(%arg0: i32) -> (i32, i32) {
    %c0_i32 = arith.constant 0 : i32
    %c0_i32_0 = arith.constant 0 : i32
    %c0_i32_1 = arith.constant 0 : i32
    return %c0_i32, %c0_i32_0 : i32, i32
  }
  func.func @transform_2(%arg0: i32) -> (i32, i32) {
    %c0_i32 = arith.constant 0 : i32
    %c0_i32_0 = arith.constant 0 : i32
    %c0_i32_1 = arith.constant 0 : i32
    return %c0_i32, %c0_i32_0 : i32, i32
  }
  func.func @transform_3(%arg0: i32) -> (i32, i32) {
    %c0_i32 = arith.constant 0 : i32
    %c0_i32_0 = arith.constant 0 : i32
    %c0_i32_1 = arith.constant 0 : i32
    return %c0_i32, %c0_i32_0 : i32, i32
  }
  func.func @transform_4(%arg0: i32) -> (i32, i32) {
    %c0_i32 = arith.constant 0 : i32
    %c0_i32_0 = arith.constant 0 : i32
    %c0_i32_1 = arith.constant 0 : i32
    return %c0_i32, %c0_i32_0 : i32, i32
  }
  func.func @transform_5(%arg0: i32) -> (i32, i32) {
    %c0_i32 = arith.constant 0 : i32
    %c0_i32_0 = arith.constant 0 : i32
    %c0_i32_1 = arith.constant 0 : i32
    return %c0_i32, %c0_i32_0 : i32, i32
  }
  func.func @transform_6(%arg0: i32) -> (i32, i32) {
    %c0_i32 = arith.constant 0 : i32
    %c0_i32_0 = arith.constant 0 : i32
    return %arg0, %c0_i32 : i32, i32
  }
}

</mosaic_0001>

<llo_original>
// kernel: time_embedding_forward.1
$region0: #{time_embedding_forward.1}
  #allocation0 [shape = 'u32[]', space=smem, size = 0x4, offset = 0x4, fixed_abs, tag = 'smem constant byte address 0x4 - core index']
  #allocation1 [shape = 'u32[144,128]{1,0:T(1,128)}', space=vmem, size = 0x12000, scoped, tag = 'internal scratch']
  %s0 = inlined_call_operand.vmem [shape: s32[8,1], index: 0, kind: input, shape index: {}]
  %s1 = inlined_call_operand.hbm [shape: f32[128,128], index: 1, kind: input, shape index: {}]
  %s2 = inlined_call_operand.hbm [shape: f32[128,128], index: 2, kind: input, shape index: {}]
  %s3 = inlined_call_operand.vmem [shape: f32[1,128], index: 3, kind: input, shape index: {}]
  %s4 = inlined_call_operand.hbm [shape: f32[128,128], index: 4, kind: input, shape index: {}]
  %s5 = inlined_call_operand.vmem [shape: f32[1,128], index: 5, kind: input, shape index: {}]
  %s6 = inlined_call_operand.hbm [shape: f32[8,128], index: 6, kind: output, shape index: {}]
  %s7 = sld [smem:[#allocation0]]
  $region46: #{time_embedding_forward.1} parent=0
    _
  %s9 = ssub.s32 1, %s7
  %s10 = scalar_select 0, %s9, %s7
  $region1: #{time_embedding_forward.1} parent=0
    #allocation2 [shape = 'u8[65536]{0}', space=vmem, size = 0x10000, scoped, tag = 'input window, operand 1, single buffered']
    #allocation3 [shape = 's32[1]{0}', space=sflag, size = 0x4, scoped, tag = 'scoped memory for time_embedding_forward.1']
    #allocation4 [shape = 's32[1]{0}', space=sflag, size = 0x4, scoped, tag = 'scoped memory for time_embedding_forward.1']
    #allocation5 [shape = 'u8[65536]{0}', space=vmem, size = 0x10000, scoped, tag = 'input window, operand 2, single buffered']
    #allocation6 [shape = 's32[1]{0}', space=sflag, size = 0x4, scoped, tag = 'scoped memory for time_embedding_forward.1']
    #allocation7 [shape = 'u8[65536]{0}', space=vmem, size = 0x10000, scoped, tag = 'input window, operand 4, single buffered']
    #allocation8 [shape = 'u8[4096]{0}', space=vmem, size = 0x1000, scoped, tag = 'output window, operand 0, single buffered']
    %11 = vsyncpa [#allocation3], 0
    %12 = vsyncpa [#allocation6], 0
    %13 = vsyncpa [#allocation4], 0
    // Predicated region
    $region2: #{time_embedding_forward.1} parent=1 // pred_check
      _
    $region3: #{time_embedding_forward.1} parent=1 // pred_check_branch
      %15 = sbr.rel (0) target = $region5
    $region4: #{time_embedding_forward.1} parent=1 // pred_region
      _
    $region5: #{time_embedding_forward.1} parent=1 // pred_fallthru
      _
    // Predicated region
    $region6: #{time_embedding_forward.1} parent=1 // pred_check
      _
    $region7: #{time_embedding_forward.1} parent=1 // pred_check_branch
      %17 = sbr.rel (0) target = $region9
    $region8: #{time_embedding_forward.1} parent=1 // pred_region
      %s19 = ssub.s32 2048, 2048
      %20 = vsyncadd [#allocation3], %s19
      %s21 = sshll.u32 [#allocation2], 4
      %s22 = int_to_ptr.vmem [resolvable:$true] %s21
      %27 = dma.hbm_to_vmem [thread:$0]  %s1, 2048, %s22, [#allocation3], 128, 128, 8
    $region9: #{time_embedding_forward.1} parent=1 // pred_fallthru
      _
    // Predicated region
    $region10: #{time_embedding_forward.1} parent=1 // pred_check
      _
    $region11: #{time_embedding_forward.1} parent=1 // pred_check_branch
      %29 = sbr.rel (0) target = $region13
    $region12: #{time_embedding_forward.1} parent=1 // pred_region
      %s31 = ssub.s32 2048, 2048
      %32 = vsyncadd [#allocation6], %s31
      %s33 = sshll.u32 [#allocation5], 4
      %s34 = int_to_ptr.vmem [resolvable:$true] %s33
      %39 = dma.hbm_to_vmem [thread:$0]  %s2, 2048, %s34, [#allocation6], 128, 128, 8
    $region13: #{time_embedding_forward.1} parent=1 // pred_fallthru
      _
    // Predicated region
    $region14: #{time_embedding_forward.1} parent=1 // pred_check
      _
    $region15: #{time_embedding_forward.1} parent=1 // pred_check_branch
      %41 = sbr.rel (0) target = $region17
    $region16: #{time_embedding_forward.1} parent=1 // pred_region
      _
    $region17: #{time_embedding_forward.1} parent=1 // pred_fallthru
      _
    // Predicated region
    $region18: #{time_embedding_forward.1} parent=1 // pred_check
      _
    $region19: #{time_embedding_forward.1} parent=1 // pred_check_branch
      %43 = sbr.rel (0) target = $region21
    $region20: #{time_embedding_forward.1} parent=1 // pred_region
      %s45 = ssub.s32 2048, 2048
      %46 = vsyncadd [#allocation6], %s45
      %s47 = sshll.u32 [#allocation7], 4
      %s48 = int_to_ptr.vmem [resolvable:$true] %s47
      %53 = dma.hbm_to_vmem [thread:$0]  %s4, 2048, %s48, [#allocation6], 128, 128, 8
    $region21: #{time_embedding_forward.1} parent=1 // pred_fallthru
      _
    // Predicated region
    $region22: #{time_embedding_forward.1} parent=1 // pred_check
      _
    $region23: #{time_embedding_forward.1} parent=1 // pred_check_branch
      %55 = sbr.rel (0) target = $region25
    $region24: #{time_embedding_forward.1} parent=1 // pred_region
      _
    $region25: #{time_embedding_forward.1} parent=1 // pred_fallthru
      _
    // Predicated region
    $region26: #{time_embedding_forward.1} parent=1 // pred_check
      _
    $region27: #{time_embedding_forward.1} parent=1 // pred_check_branch
      %57 = sbr.rel (0) target = $region29
    $region28: #{time_embedding_forward.1} parent=1 // pred_region
      %58 = dma.done [#allocation3], 2048
    $region29: #{time_embedding_forward.1} parent=1 // pred_fallthru
      _
    // Predicated region
    $region30: #{time_embedding_forward.1} parent=1 // pred_check
      _
    $region31: #{time_embedding_forward.1} parent=1 // pred_check_branch
      %60 = sbr.rel (0) target = $region33
    $region32: #{time_embedding_forward.1} parent=1 // pred_region
      %61 = dma.done [#allocation6], 2048
    $region33: #{time_embedding_forward.1} parent=1 // pred_fallthru
      _
    // Predicated region
    $region34: #{time_embedding_forward.1} parent=1 // pred_check
      _
    $region35: #{time_embedding_forward.1} parent=1 // pred_check_branch
      %63 = sbr.rel (0) target = $region37
    $region36: #{time_embedding_forward.1} parent=1 // pred_region
      %64 = dma.done [#allocation6], 2048
    $region37: #{time_embedding_forward.1} parent=1 // pred_fallthru
      _
    %v65 = vld [vmem:[%s0] sm:$0xff]
    %v66 = vlaneseq
    %v67 = vand.u32 %v66, 127
    %68 = vset.pattern.permute.xlu0 0
    %69 = vperm.xlu0 %68, %v65
    %v70 = vpop.permute.xlu0 %69
    %vm71 = vcmp.eq.s32.totalorder %v67, %v70
    %v72 = vsel %vm71, 1, 0
    %v73 = vcvt.s32.f32 %v72
    %v74 = vld [vmem:[#allocation2] sm:$0xff]
    %v75 = vld [vmem:[#allocation2 + $0x8] sm:$0xff]
    %v76 = vld [vmem:[#allocation2 + $0x10] sm:$0xff]
    %v77 = vld [vmem:[#allocation2 + $0x18] sm:$0xff]
    %v78 = vld [vmem:[#allocation2 + $0x20] sm:$0xff]
    %v79 = vld [vmem:[#allocation2 + $0x28] sm:$0xff]
    %v80 = vld [vmem:[#allocation2 + $0x30] sm:$0xff]
    %v81 = vld [vmem:[#allocation2 + $0x38] sm:$0xff]
    %v82 = vld [vmem:[#allocation2 + $0x40] sm:$0xff]
    %v83 = vld [vmem:[#allocation2 + $0x48] sm:$0xff]
    %v84 = vld [vmem:[#allocation2 + $0x50] sm:$0xff]
    %v85 = vld [vmem:[#allocation2 + $0x58] sm:$0xff]
    %v86 = vld [vmem:[#allocation2 + $0x60] sm:$0xff]
    %v87 = vld [vmem:[#allocation2 + $0x68] sm:$0xff]
    %v88 = vld [vmem:[#allocation2 + $0x70] sm:$0xff]
    %v89 = vld [vmem:[#allocation2 + $0x78] sm:$0xff]
    %90 = vmatprep.subr.mxu0 0.0
    %91 = vmatpush1.msra.mxu0 %v74
    %92 = vmatprep.subr.mxu0 0.0
    %93 = vmatpush1.msra.mxu0 %v75
    %94 = vmatprep.subr.mxu0 0.0
    %95 = vmatpush1.msra.mxu0 %v76
    %96 = vmatprep.subr.mxu0 0.0
    %97 = vmatpush1.msra.mxu0 %v77
    %98 = vmatprep.subr.mxu0 0.0
    %99 = vmatpush1.msra.mxu0 %v78
    %100 = vmatprep.subr.mxu0 0.0
    %101 = vmatpush1.msra.mxu0 %v79
    %102 = vmatprep.subr.mxu0 0.0
    %103 = vmatpush1.msra.mxu0 %v80
    %104 = vmatprep.subr.mxu0 0.0
    %105 = vmatpush1.msra.mxu0 %v81
    %106 = vmatprep.subr.mxu0 0.0
    %107 = vmatpush1.msra.mxu0 %v82
    %108 = vmatprep.subr.mxu0 0.0
    %109 = vmatpush1.msra.mxu0 %v83
    %110 = vmatprep.subr.mxu0 0.0
    %111 = vmatpush1.msra.mxu0 %v84
    %112 = vmatprep.subr.mxu0 0.0
    %113 = vmatpush1.msra.mxu0 %v85
    %114 = vmatprep.subr.mxu0 0.0
    %115 = vmatpush1.msra.mxu0 %v86
    %116 = vmatprep.subr.mxu0 0.0
    %117 = vmatpush1.msra.mxu0 %v87
    %118 = vmatprep.subr.mxu0 0.0
    %119 = vmatpush1.msra.mxu0 %v88
    %120 = vmatprep.subr.mxu0 0.0
    %121 = vmatpush1.msra.mxu0 %v89
    %122 = vmatprep.subr.mxu0 0.0
    %123 = vmatpush1.msra.mxu0 0.0
    %124 = vmatprep.subr.mxu0 0.0
    %125 = vmatpush1.msra.mxu0 0.0
    %126 = vmatprep.subr.mxu0 0.0
    %127 = vmatpush1.msra.mxu0 0.0
    %128 = vmatprep.subr.mxu0 0.0
    %129 = vmatpush1.msra.mxu0 0.0
    %130 = vmatprep.subr.mxu0 0.0
    %131 = vmatpush1.msra.mxu0 0.0
    %132 = vmatprep.subr.mxu0 0.0
    %133 = vmatpush1.msra.mxu0 0.0
    %134 = vmatprep.subr.mxu0 0.0
    %135 = vmatpush1.msra.mxu0 0.0
    %136 = vmatprep.subr.mxu0 0.0
    %137 = vmatpush1.msra.mxu0 0.0
    %138 = vmatprep.subr.mxu0 0.0
    %139 = vmatpush1.msra.mxu0 0.0
    %140 = vmatprep.subr.mxu0 0.0
    %141 = vmatpush1.msra.mxu0 0.0
    %142 = vmatprep.subr.mxu0 0.0
    %143 = vmatpush1.msra.mxu0 0.0
    %144 = vmatprep.subr.mxu0 0.0
    %145 = vmatpush1.msra.mxu0 0.0
    %146 = vmatprep.subr.mxu0 0.0
    %147 = vmatpush1.msra.mxu0 0.0
    %148 = vmatprep.subr.mxu0 0.0
    %149 = vmatpush1.msra.mxu0 0.0
    %150 = vmatprep.subr.mxu0 0.0
    %151 = vmatpush1.msra.mxu0 0.0
    %152 = vmatprep.subr.mxu0 0.0
    %153 = vmatpush1.msra.mxu0 0.0
    %154 = vmatprep.mubr.f32.mxu0 0.0
    %155 = vmatmul.mubr.f32.gmra.mrb[0].mxu0 %v73
    %v156 = vpop.f32.mrb[0].mxu0
    %v157 = vadd.f32 0.0, %v156
    %v158 = vpop.f32.mrb[0].mxu0
    %159 = vdwg.mxu0
    %v160 = vld [vmem:[#allocation5] sm:$0xff]
    %v161 = vld [vmem:[#allocation5 + $0x8] sm:$0xff]
    %v162 = vld [vmem:[#allocation5 + $0x10] sm:$0xff]
    %v163 = vld [vmem:[#allocation5 + $0x18] sm:$0xff]
    %v164 = vld [vmem:[#allocation5 + $0x20] sm:$0xff]
    %v165 = vld [vmem:[#allocation5 + $0x28] sm:$0xff]
    %v166 = vld [vmem:[#allocation5 + $0x30] sm:$0xff]
    %v167 = vld [vmem:[#allocation5 + $0x38] sm:$0xff]
    %v168 = vld [vmem:[#allocation5 + $0x40] sm:$0xff]
    %v169 = vld [vmem:[#allocation5 + $0x48] sm:$0xff]
    %v170 = vld [vmem:[#allocation5 + $0x50] sm:$0xff]
    %v171 = vld [vmem:[#allocation5 + $0x58] sm:$0xff]
    %v172 = vld [vmem:[#allocation5 + $0x60] sm:$0xff]
    %v173 = vld [vmem:[#allocation5 + $0x68] sm:$0xff]
    %v174 = vld [vmem:[#allocation5 + $0x70] sm:$0xff]
    %v175 = vld [vmem:[#allocation5 + $0x78] sm:$0xff]
    %v176 = vld [vmem:[%s3] sm:$0x1]
    %v178 = vlaneseq
    %v179 = vshrl.u32 %v178, 7
    %v180 = vsub.s32 0, %v179
    %v181 = vrot.slane %v176, %v180
    %183 = vmatprep.subr.mxu0 0.0
    %184 = vmatpush1.msra.mxu0 %v160
    %185 = vmatprep.subr.mxu0 0.0
    %186 = vmatpush1.msra.mxu0 %v161
    %187 = vmatprep.subr.mxu0 0.0
    %188 = vmatpush1.msra.mxu0 %v162
    %189 = vmatprep.subr.mxu0 0.0
    %190 = vmatpush1.msra.mxu0 %v163
    %191 = vmatprep.subr.mxu0 0.0
    %192 = vmatpush1.msra.mxu0 %v164
    %193 = vmatprep.subr.mxu0 0.0
    %194 = vmatpush1.msra.mxu0 %v165
    %195 = vmatprep.subr.mxu0 0.0
    %196 = vmatpush1.msra.mxu0 %v166
    %197 = vmatprep.subr.mxu0 0.0
    %198 = vmatpush1.msra.mxu0 %v167
    %199 = vmatprep.subr.mxu0 0.0
    %200 = vmatpush1.msra.mxu0 %v168
    %201 = vmatprep.subr.mxu0 0.0
    %202 = vmatpush1.msra.mxu0 %v169
    %203 = vmatprep.subr.mxu0 0.0
    %204 = vmatpush1.msra.mxu0 %v170
    %205 = vmatprep.subr.mxu0 0.0
    %206 = vmatpush1.msra.mxu0 %v171
    %207 = vmatprep.subr.mxu0 0.0
    %208 = vmatpush1.msra.mxu0 %v172
    %209 = vmatprep.subr.mxu0 0.0
    %210 = vmatpush1.msra.mxu0 %v173
    %211 = vmatprep.subr.mxu0 0.0
    %212 = vmatpush1.msra.mxu0 %v174
    %213 = vmatprep.subr.mxu0 0.0
    %214 = vmatpush1.msra.mxu0 %v175
    %215 = vmatprep.subr.mxu0 0.0
    %216 = vmatpush1.msra.mxu0 0.0
    %217 = vmatprep.subr.mxu0 0.0
    %218 = vmatpush1.msra.mxu0 0.0
    %219 = vmatprep.subr.mxu0 0.0
    %220 = vmatpush1.msra.mxu0 0.0
    %221 = vmatprep.subr.mxu0 0.0
    %222 = vmatpush1.msra.mxu0 0.0
    %223 = vmatprep.subr.mxu0 0.0
    %224 = vmatpush1.msra.mxu0 0.0
    %225 = vmatprep.subr.mxu0 0.0
    %226 = vmatpush1.msra.mxu0 0.0
    %227 = vmatprep.subr.mxu0 0.0
    %228 = vmatpush1.msra.mxu0 0.0
    %229 = vmatprep.subr.mxu0 0.0
    %230 = vmatpush1.msra.mxu0 0.0
    %231 = vmatprep.subr.mxu0 0.0
    %232 = vmatpush1.msra.mxu0 0.0
    %233 = vmatprep.subr.mxu0 0.0
    %234 = vmatpush1.msra.mxu0 0.0
    %235 = vmatprep.subr.mxu0 0.0
    %236 = vmatpush1.msra.mxu0 0.0
    %237 = vmatprep.subr.mxu0 0.0
    %238 = vmatpush1.msra.mxu0 0.0
    %239 = vmatprep.subr.mxu0 0.0
    %240 = vmatpush1.msra.mxu0 0.0
    %241 = vmatprep.subr.mxu0 0.0
    %242 = vmatpush1.msra.mxu0 0.0
    %243 = vmatprep.subr.mxu0 0.0
    %244 = vmatpush1.msra.mxu0 0.0
    %245 = vmatprep.subr.mxu0 0.0
    %246 = vmatpush1.msra.mxu0 0.0
    %247 = vmatprep.mubr.f32.mxu0 0.0
    %248 = vmatmul.mubr.f32.gmra.mrb[0].mxu0 %v157
    %v249 = vpop.f32.mrb[0].mxu0
    %v250 = vadd.f32 %v181, %v249
    %v251 = vpop.f32.mrb[0].mxu0
    %252 = vdwg.mxu0
    %v253 = vxor.u32 %v250, 2147483648
    %v254 = vmul.f32 %v253, 1.442695
    %v255 = vpow.pop %v254
    %v256 = vadd.f32 %v255, 1.0
    %v257 = vrcp.pop %v256
    %v258 = vmul.f32 1.0, %v257
    %v259 = vmul.f32 %v250, %v258
    %v260 = vld [vmem:[#allocation7] sm:$0xff]
    %v261 = vld [vmem:[#allocation7 + $0x8] sm:$0xff]
    %v262 = vld [vmem:[#allocation7 + $0x10] sm:$0xff]
    %v263 = vld [vmem:[#allocation7 + $0x18] sm:$0xff]
    %v264 = vld [vmem:[#allocation7 + $0x20] sm:$0xff]
    %v265 = vld [vmem:[#allocation7 + $0x28] sm:$0xff]
    %v266 = vld [vmem:[#allocation7 + $0x30] sm:$0xff]
    %v267 = vld [vmem:[#allocation7 + $0x38] sm:$0xff]
    %v268 = vld [vmem:[#allocation7 + $0x40] sm:$0xff]
    %v269 = vld [vmem:[#allocation7 + $0x48] sm:$0xff]
    %v270 = vld [vmem:[#allocation7 + $0x50] sm:$0xff]
    %v271 = vld [vmem:[#allocation7 + $0x58] sm:$0xff]
    %v272 = vld [vmem:[#allocation7 + $0x60] sm:$0xff]
    %v273 = vld [vmem:[#allocation7 + $0x68] sm:$0xff]
    %v274 = vld [vmem:[#allocation7 + $0x70] sm:$0xff]
    %v275 = vld [vmem:[#allocation7 + $0x78] sm:$0xff]
    %v276 = vld [vmem:[%s5] sm:$0x1]
    %v278 = vlaneseq
    %v279 = vshrl.u32 %v278, 7
    %v280 = vsub.s32 0, %v279
    %v281 = vrot.slane %v276, %v280
    %283 = vmatprep.subr.mxu0 0.0
    %284 = vmatpush1.msra.mxu0 %v260
    %285 = vmatprep.subr.mxu0 0.0
    %286 = vmatpush1.msra.mxu0 %v261
    %287 = vmatprep.subr.mxu0 0.0
    %288 = vmatpush1.msra.mxu0 %v262
    %289 = vmatprep.subr.mxu0 0.0
    %290 = vmatpush1.msra.mxu0 %v263
    %291 = vmatprep.subr.mxu0 0.0
    %292 = vmatpush1.msra.mxu0 %v264
    %293 = vmatprep.subr.mxu0 0.0
    %294 = vmatpush1.msra.mxu0 %v265
    %295 = vmatprep.subr.mxu0 0.0
    %296 = vmatpush1.msra.mxu0 %v266
    %297 = vmatprep.subr.mxu0 0.0
    %298 = vmatpush1.msra.mxu0 %v267
    %299 = vmatprep.subr.mxu0 0.0
    %300 = vmatpush1.msra.mxu0 %v268
    %301 = vmatprep.subr.mxu0 0.0
    %302 = vmatpush1.msra.mxu0 %v269
    %303 = vmatprep.subr.mxu0 0.0
    %304 = vmatpush1.msra.mxu0 %v270
    %305 = vmatprep.subr.mxu0 0.0
    %306 = vmatpush1.msra.mxu0 %v271
    %307 = vmatprep.subr.mxu0 0.0
    %308 = vmatpush1.msra.mxu0 %v272
    %309 = vmatprep.subr.mxu0 0.0
    %310 = vmatpush1.msra.mxu0 %v273
    %311 = vmatprep.subr.mxu0 0.0
    %312 = vmatpush1.msra.mxu0 %v274
    %313 = vmatprep.subr.mxu0 0.0
    %314 = vmatpush1.msra.mxu0 %v275
    %315 = vmatprep.subr.mxu0 0.0
    %316 = vmatpush1.msra.mxu0 0.0
    %317 = vmatprep.subr.mxu0 0.0
    %318 = vmatpush1.msra.mxu0 0.0
    %319 = vmatprep.subr.mxu0 0.0
    %320 = vmatpush1.msra.mxu0 0.0
    %321 = vmatprep.subr.mxu0 0.0
    %322 = vmatpush1.msra.mxu0 0.0
    %323 = vmatprep.subr.mxu0 0.0
    %324 = vmatpush1.msra.mxu0 0.0
    %325 = vmatprep.subr.mxu0 0.0
    %326 = vmatpush1.msra.mxu0 0.0
    %327 = vmatprep.subr.mxu0 0.0
    %328 = vmatpush1.msra.mxu0 0.0
    %329 = vmatprep.subr.mxu0 0.0
    %330 = vmatpush1.msra.mxu0 0.0
    %331 = vmatprep.subr.mxu0 0.0
    %332 = vmatpush1.msra.mxu0 0.0
    %333 = vmatprep.subr.mxu0 0.0
    %334 = vmatpush1.msra.mxu0 0.0
    %335 = vmatprep.subr.mxu0 0.0
    %336 = vmatpush1.msra.mxu0 0.0
    %337 = vmatprep.subr.mxu0 0.0
    %338 = vmatpush1.msra.mxu0 0.0
    %339 = vmatprep.subr.mxu0 0.0
    %340 = vmatpush1.msra.mxu0 0.0
    %341 = vmatprep.subr.mxu0 0.0
    %342 = vmatpush1.msra.mxu0 0.0
    %343 = vmatprep.subr.mxu0 0.0
    %344 = vmatpush1.msra.mxu0 0.0
    %345 = vmatprep.subr.mxu0 0.0
    %346 = vmatpush1.msra.mxu0 0.0
    %347 = vmatprep.mubr.f32.mxu0 0.0
    %348 = vmatmul.mubr.f32.gmra.mrb[0].mxu0 %v259
    %v349 = vpop.f32.mrb[0].mxu0
    %v350 = vadd.f32 %v281, %v349
    %v351 = vpop.f32.mrb[0].mxu0
    %352 = vdwg.mxu0
    %353 = vst [vmem:[#allocation8] sm:$0xff] %v350
    // Predicated region
    $region38: #{time_embedding_forward.1} parent=1 // pred_check
      _
    $region39: #{time_embedding_forward.1} parent=1 // pred_check_branch
      %355 = sbr.rel (0) target = $region41
    $region40: #{time_embedding_forward.1} parent=1 // pred_region
      %s357 = ssub.s32 128, 128
      %358 = vsyncadd [#allocation4], %s357
      %s360 = sshll.u32 [#allocation8], 4
      %s361 = int_to_ptr.vmem [resolvable:$true] %s360
      %363 = dma.vmem_to_hbm [thread:$0]  %s361, 128, %s6, [#allocation4]
    $region41: #{time_embedding_forward.1} parent=1 // pred_fallthru
      _
    // Predicated region
    $region42: #{time_embedding_forward.1} parent=1 // pred_check
      _
    $region43: #{time_embedding_forward.1} parent=1 // pred_check_branch
      %365 = sbr.rel (0) target = $region45
    $region44: #{time_embedding_forward.1} parent=1 // pred_region
      %366 = dma.done [#allocation4], 128
    $region45: #{time_embedding_forward.1} parent=1 // pred_fallthru
      _
    %367 = vsyncpa [#allocation3], 1
    %368 = vsyncpa [#allocation6], 1
    %369 = vsyncpa [#allocation4], 1

</llo_original>
